<compile_context>
chip_gen: v7x
topology: tpu7x:2x2x1
jax: 0.10.0
libtpu: 0.0.40
codegen_flags: <defaults>
</compile_context>

<pallas_src>
import jax
import jax.numpy as jnp
from jax.experimental import pallas as pl
from jax.experimental.pallas import tpu as pltpu


_LANE = 128
_SUBLANE = 8
# Double-buffered h/out tile budget.  Kept under the smallest scoped-VMEM
# default (16 MiB on v5e) and far under v7x's 64 MiB physical VMEM per TC.
_VMEM_TILE_BUDGET = 24 * 1024 * 1024


def _fused_heads_kernel(h_ref, w_ref, b_ref, out_ref):
    # h_ref: [tm, H], w_ref: [H, Np], b_ref: [1, Np], out_ref: [tm, Np]
    out_ref[...] = (
        jnp.dot(h_ref[...], w_ref[...], preferred_element_type=jnp.float32)
        + b_ref[...].astype(jnp.float32)
    ).astype(out_ref.dtype)


def _pick_batch_tile(B, target, vmem_cap_rows):
    """Pick a batch tile: as big as possible, VMEM-safe, dividing B exactly."""
    tm = min(B, target, vmem_cap_rows)
    if tm <= 0:
        tm = B
    if B % tm == 0:
        return tm
    # Largest multiple-of-8 divisor of B that is <= tm (keeps (8,128) rule).
    d = (tm // _SUBLANE) * _SUBLANE
    while d >= _SUBLANE:
        if B % d == 0:
            return d
        d -= _SUBLANE
    # No clean divisor: single full-array block (full-dim blocks are always legal).
    return B


def make_policy_value_net(wp, bp, wv, bv, *, batch_tile=8192,
                          param_dtype=jnp.float32, out_dtype=jnp.float32):
    """Build a jitted forward for PolicyValueNet.

    wp: [A, H]  (policy_head.weight, PyTorch layout [out, in])
    bp: [A]     (policy_head.bias)
    wv: [1, H]  (value_head.weight)
    bv: [1]     (value_head.bias)

    Returns forward(h) -> (policy_logits [B, A], value [B, 1]).
    """
    A, H = wp.shape
    N = A + 1
    N_pad = _LANE * ((N + _LANE - 1) // _LANE)   # lane-dense output columns

    # One-time (outside the per-call path) fusion + transpose + zero-padding.
    w_fused = jnp.zeros((H, N_pad), dtype=param_dtype)
    w_fused = w_fused.at[:, :A].set(wp.T.astype(param_dtype))
    w_fused = w_fused.at[:, A].set(wv.reshape(H).astype(param_dtype))
    b_fused = jnp.zeros((1, N_pad), dtype=param_dtype)
    b_fused = b_fused.at[0, :A].set(bp.astype(param_dtype))
    b_fused = b_fused.at[0, A].set(bv.reshape(()).astype(param_dtype))

    # Max rows per tile such that double-buffered h + out tiles fit the budget
    # (sized with 4 B/elem worst case so bf16 inputs are strictly safer).
    bytes_per_row = 4 * (H + N_pad)
    vmem_cap_rows = max(
        _SUBLANE,
        (_VMEM_TILE_BUDGET // (2 * bytes_per_row)) // _SUBLANE * _SUBLANE,
    )

    vmem = pltpu.MemorySpace.VMEM
    itemsize_w = jnp.dtype(param_dtype).itemsize
    itemsize_o = jnp.dtype(out_dtype).itemsize

    def forward(h):
        B = h.shape[0]
        itemsize_h = jnp.dtype(h.dtype).itemsize

        tm = _pick_batch_tile(B, batch_tile, vmem_cap_rows)
        grid = (B // tm,)

        cost = pl.CostEstimate(
            flops=2 * B * H * N_pad,
            transcendentals=0,
            bytes_accessed=(B * H * itemsize_h
                            + (H + 1) * N_pad * itemsize_w
                            + B * N_pad * itemsize_o),
        )

        # Double-buffered working set + weights/bias, with headroom, clamped to
        # a limit that is valid on every generation (v7x VMEM = 64 MiB / TC).
        needed = 2 * (tm * H * itemsize_h
                      + tm * N_pad * itemsize_o
                      + H * N_pad * itemsize_w
                      + N_pad * itemsize_w)
        vmem_limit = int(min(48 * 1024 * 1024,
                             max(16 * 1024 * 1024, 2 * needed)))

        fused = pl.pallas_call(
            _fused_heads_kernel,
            grid=grid,
            in_specs=[
                pl.BlockSpec((tm, H), lambda i: (i, 0), memory_space=vmem),
                pl.BlockSpec((H, N_pad), lambda i: (0, 0), memory_space=vmem),
                pl.BlockSpec((1, N_pad), lambda i: (0, 0), memory_space=vmem),
            ],
            out_specs=pl.BlockSpec((tm, N_pad), lambda i: (i, 0),
                                   memory_space=vmem),
            out_shape=jax.ShapeDtypeStruct((B, N_pad), out_dtype),
            compiler_params=pltpu.CompilerParams(
                dimension_semantics=("parallel",),
                vmem_limit_bytes=vmem_limit,
            ),
            cost_estimate=cost,
        )(h, w_fused, b_fused)

        # TODO(synk): if the consumer can take the fused lane-padded slab
        # directly (softmax over [:, :A], value at column A), skip these slices
        # to avoid an extra HBM round-trip on the output.
        policy_logits = fused[:, :A]
        value = fused[:, A:A + 1]
        return policy_logits, value

    return jax.jit(forward)


if __name__ == "__main__":
    B, H, A = 2, 32, 8  # batch, hidden_dim, num_actions

    key = jax.random.PRNGKey(0)
    k_h, k_wp, k_bp, k_wv, k_bv, k_big = jax.random.split(key, 6)

    # Deterministic synthetic parameters (PyTorch nn.Linear shapes).
    h = jax.random.normal(k_h, (B, H), dtype=jnp.float32)
    wp = jax.random.normal(k_wp, (A, H), dtype=jnp.float32) * 0.1   # policy_head.weight
    bp = jax.random.normal(k_bp, (A,), dtype=jnp.float32) * 0.1     # policy_head.bias
    wv = jax.random.normal(k_wv, (1, H), dtype=jnp.float32) * 0.1   # value_head.weight
    bv = jax.random.normal(k_bv, (1,), dtype=jnp.float32) * 0.1     # value_head.bias

    net = make_policy_value_net(wp, bp, wv, bv)

    # Small-batch path (single full block, full-dim block shapes).
    policy_logits, value = net(h)
    jax.block_until_ready((policy_logits, value))

    ref_policy = h @ wp.T + bp
    ref_value = h @ wv.T + bv
    assert policy_logits.shape == (B, A) and value.shape == (B, 1)
    assert jnp.allclose(policy_logits, ref_policy, atol=1e-5), "policy mismatch"
    assert jnp.allclose(value, ref_value, atol=1e-5), "value mismatch"

    # Larger batch: still one fat block (preferred on 1-TC v5e/v6e).
    Bb = 512
    h_big = jax.random.normal(k_big, (Bb, H), dtype=jnp.float32)
    pol_big, val_big = net(h_big)
    jax.block_until_ready((pol_big, val_big))
    assert jnp.allclose(pol_big, h_big @ wp.T + bp, atol=1e-4), "big policy mismatch"
    assert jnp.allclose(val_big, h_big @ wv.T + bv, atol=1e-4), "big value mismatch"

    # Force the tiled path (>=2 "parallel" grid steps -> both TCs on v7x).
    net_tiled = make_policy_value_net(wp, bp, wv, bv, batch_tile=128)
    pol_t, val_t = net_tiled(h_big)
    jax.block_until_ready((pol_t, val_t))
    assert jnp.allclose(pol_t, h_big @ wp.T + bp, atol=1e-4), "tiled policy mismatch"
    assert jnp.allclose(val_t, h_big @ wv.T + bv, atol=1e-4), "tiled value mismatch"

    print("KERNEL_OK")
</pallas_src>

<mosaic_0001>
module attributes {stable_mosaic.version = 11 : i64} {
  func.func @_fused_heads_kernel(%arg0: i32, %arg1: memref<2x32xf32, #tpu.memory_space<vmem>>, %arg2: memref<32x128xf32, #tpu.memory_space<vmem>>, %arg3: memref<1x128xf32, #tpu.memory_space<vmem>>, %arg4: memref<2x128xf32, #tpu.memory_space<vmem>>) attributes {dimension_semantics = [#tpu.dimension_semantics<parallel>], iteration_bounds = array<i64: 1>, scalar_prefetch = 0 : i64, scratch_operands = 0 : i64, tpu.core_type = #tpu.core_type<tc>, window_params = [{transform_indices = @transform_0, window_bounds = array<i64: 2, 32>}, {pipeline_mode = #tpu.pipeline_mode<synchronous>, transform_indices = @transform_1, window_bounds = array<i64: 32, 128>}, {pipeline_mode = #tpu.pipeline_mode<synchronous>, transform_indices = @transform_2, window_bounds = array<i64: 1, 128>}, {transform_indices = @transform_3, window_bounds = array<i64: 2, 128>}]} {
    %c0 = arith.constant 0 : index
    %c0_0 = arith.constant 0 : index
    %0 = vector.load %arg1[%c0, %c0_0] : memref<2x32xf32, #tpu.memory_space<vmem>>, vector<2x32xf32>
    %c0_1 = arith.constant 0 : index
    %c0_2 = arith.constant 0 : index
    %1 = vector.load %arg2[%c0_1, %c0_2] : memref<32x128xf32, #tpu.memory_space<vmem>>, vector<32x128xf32>
    %cst = arith.constant dense<0.000000e+00> : vector<2x128xf32>
    %2 = tpu.matmul %0, %1, %cst {dimension_numbers = #tpu.dot_dimension_numbers<[1], [0], [0], [1], [0, 0, 1, 1], [], []>} : vector<2x32xf32>, vector<32x128xf32>, vector<2x128xf32> -> vector<2x128xf32>
    %c0_3 = arith.constant 0 : index
    %c0_4 = arith.constant 0 : index
    %3 = vector.load %arg3[%c0_3, %c0_4] : memref<1x128xf32, #tpu.memory_space<vmem>>, vector<1x128xf32>
    %4 = vector.broadcast %3 : vector<1x128xf32> to vector<2x128xf32>
    %5 = arith.addf %2, %4 : vector<2x128xf32>
    %c0_5 = arith.constant 0 : index
    %c0_6 = arith.constant 0 : index
    %6 = vector.load %arg4[%c0_5, %c0_6] : memref<2x128xf32, #tpu.memory_space<vmem>>, vector<2x128xf32>
    tpu.vector_store %arg4[%c0_5, %c0_6], %5 {strides = array<i32>} : memref<2x128xf32, #tpu.memory_space<vmem>>, vector<2x128xf32>,
    return
  }
  func.func @transform_0(%arg0: i32) -> (i32, i32) {
    %c0_i32 = arith.constant 0 : i32
    %c0_i32_0 = arith.constant 0 : i32
    return %arg0, %c0_i32 : i32, i32
  }
  func.func @transform_1(%arg0: i32) -> (i32, i32) {
    %c0_i32 = arith.constant 0 : i32
    %c0_i32_0 = arith.constant 0 : i32
    %c0_i32_1 = arith.constant 0 : i32
    return %c0_i32, %c0_i32_0 : i32, i32
  }
  func.func @transform_2(%arg0: i32) -> (i32, i32) {
    %c0_i32 = arith.constant 0 : i32
    %c0_i32_0 = arith.constant 0 : i32
    %c0_i32_1 = arith.constant 0 : i32
    return %c0_i32, %c0_i32_0 : i32, i32
  }
  func.func @transform_3(%arg0: i32) -> (i32, i32) {
    %c0_i32 = arith.constant 0 : i32
    %c0_i32_0 = arith.constant 0 : i32
    return %arg0, %c0_i32 : i32, i32
  }
}

</mosaic_0001>

<llo_original>
// kernel: forward.1
$region0: #{forward.1}
  #allocation0 [shape = 'u32[]', space=smem, size = 0x4, offset = 0x4, fixed_abs, tag = 'smem constant byte address 0x4 - core index']
  #allocation1 [shape = 'u32[144,128]{1,0:T(1,128)}', space=vmem, size = 0x12000, scoped, tag = 'internal scratch']
  %s0 = inlined_call_operand.hbm [shape: f32[2,32], index: 0, kind: input, shape index: {}]
  %s1 = inlined_call_operand.hbm [shape: f32[32,128], index: 1, kind: input, shape index: {}]
  %s2 = inlined_call_operand.vmem [shape: f32[1,128], index: 2, kind: input, shape index: {}]
  %s3 = inlined_call_operand.vmem [shape: f32[2,128], index: 3, kind: output, shape index: {}]
  %s4 = sld [smem:[#allocation0]]
  $region30: #{forward.1} parent=0
    _
  %s6 = ssub.s32 1, %s4
  %s7 = scalar_select 0, %s6, %s4
  $region1: #{forward.1} parent=0
    #allocation2 [shape = 'u8[1024]{0}', space=vmem, size = 0x400, scoped, tag = 'input window, operand 0, single buffered']
    #allocation3 [shape = 's32[1]{0}', space=sflag, size = 0x4, scoped, tag = 'scoped memory for forward.1']
    #allocation4 [shape = 'u8[16384]{0}', space=vmem, size = 0x4000, scoped, tag = 'input window, operand 1, single buffered']
    #allocation5 [shape = 's32[1]{0}', space=sflag, size = 0x4, scoped, tag = 'scoped memory for forward.1']
    %8 = vsyncpa [#allocation3], 0
    %9 = vsyncpa [#allocation5], 0
    // Predicated region
    $region2: #{forward.1} parent=1 // pred_check
      _
    $region3: #{forward.1} parent=1 // pred_check_branch
      %11 = sbr.rel (0) target = $region5
    $region4: #{forward.1} parent=1 // pred_region
      %s13 = ssub.s32 32, 32
      %14 = vsyncadd [#allocation3], %s13
      %s16 = sshll.u32 [#allocation2], 4
      %s17 = int_to_ptr.vmem [resolvable:$true] %s16
      %19 = dma.hbm_to_vmem [thread:$0]  %s0, 32, %s17, [#allocation3]
    $region5: #{forward.1} parent=1 // pred_fallthru
      _
    // Predicated region
    $region6: #{forward.1} parent=1 // pred_check
      _
    $region7: #{forward.1} parent=1 // pred_check_branch
      %21 = sbr.rel (0) target = $region9
    $region8: #{forward.1} parent=1 // pred_region
      %s23 = ssub.s32 512, 512
      %24 = vsyncadd [#allocation5], %s23
      %s25 = sshll.u32 [#allocation4], 4
      %s26 = int_to_ptr.vmem [resolvable:$true] %s25
      %31 = dma.hbm_to_vmem [thread:$0]  %s1, 512, %s26, [#allocation5], 128, 128, 8
    $region9: #{forward.1} parent=1 // pred_fallthru
      _
    // Predicated region
    $region10: #{forward.1} parent=1 // pred_check
      _
    $region11: #{forward.1} parent=1 // pred_check_branch
      %33 = sbr.rel (0) target = $region13
    $region12: #{forward.1} parent=1 // pred_region
      _
    $region13: #{forward.1} parent=1 // pred_fallthru
      _
    // Predicated region
    $region14: #{forward.1} parent=1 // pred_check
      _
    $region15: #{forward.1} parent=1 // pred_check_branch
      %35 = sbr.rel (0) target = $region17
    $region16: #{forward.1} parent=1 // pred_region
      %36 = dma.done [#allocation3], 32
    $region17: #{forward.1} parent=1 // pred_fallthru
      _
    // Predicated region
    $region18: #{forward.1} parent=1 // pred_check
      _
    $region19: #{forward.1} parent=1 // pred_check_branch
      %38 = sbr.rel (0) target = $region21
    $region20: #{forward.1} parent=1 // pred_region
      %39 = dma.done [#allocation5], 512
    $region21: #{forward.1} parent=1 // pred_fallthru
      _
    %v40 = vld [vmem:[#allocation2] sm:$0x3]
    %v41 = vld [vmem:[#allocation4] sm:$0xff]
    %v42 = vld [vmem:[#allocation4 + $0x8] sm:$0xff]
    %v43 = vld [vmem:[#allocation4 + $0x10] sm:$0xff]
    %v44 = vld [vmem:[#allocation4 + $0x18] sm:$0xff]
    %v45 = vld [vmem:[%s2] sm:$0x1]
    %v47 = vlaneseq
    %v48 = vshrl.u32 %v47, 7
    %v49 = vsub.s32 0, %v48
    %v50 = vrot.slane %v45, %v49
    %vm52 = vcmask 261120
    %v54 = vsel %vm52, %v40, 0
    %56 = vmatprep.subr.mxu0 0.0
    %57 = vmatpush1.msra.mxu0 %v41
    %58 = vmatprep.subr.mxu0 0.0
    %59 = vmatpush1.msra.mxu0 %v42
    %60 = vmatprep.subr.mxu0 0.0
    %61 = vmatpush1.msra.mxu0 %v43
    %62 = vmatprep.subr.mxu0 0.0
    %63 = vmatpush1.msra.mxu0 %v44
    %64 = vmatprep.subr.mxu0 0.0
    %65 = vmatpush1.msra.mxu0 0.0
    %66 = vmatprep.subr.mxu0 0.0
    %67 = vmatpush1.msra.mxu0 0.0
    %68 = vmatprep.subr.mxu0 0.0
    %69 = vmatpush1.msra.mxu0 0.0
    %70 = vmatprep.subr.mxu0 0.0
    %71 = vmatpush1.msra.mxu0 0.0
    %72 = vmatprep.subr.mxu0 0.0
    %73 = vmatpush1.msra.mxu0 0.0
    %74 = vmatprep.subr.mxu0 0.0
    %75 = vmatpush1.msra.mxu0 0.0
    %76 = vmatprep.subr.mxu0 0.0
    %77 = vmatpush1.msra.mxu0 0.0
    %78 = vmatprep.subr.mxu0 0.0
    %79 = vmatpush1.msra.mxu0 0.0
    %80 = vmatprep.subr.mxu0 0.0
    %81 = vmatpush1.msra.mxu0 0.0
    %82 = vmatprep.subr.mxu0 0.0
    %83 = vmatpush1.msra.mxu0 0.0
    %84 = vmatprep.subr.mxu0 0.0
    %85 = vmatpush1.msra.mxu0 0.0
    %86 = vmatprep.subr.mxu0 0.0
    %87 = vmatpush1.msra.mxu0 0.0
    %88 = vmatprep.subr.mxu0 0.0
    %89 = vmatpush1.msra.mxu0 0.0
    %90 = vmatprep.subr.mxu0 0.0
    %91 = vmatpush1.msra.mxu0 0.0
    %92 = vmatprep.subr.mxu0 0.0
    %93 = vmatpush1.msra.mxu0 0.0
    %94 = vmatprep.subr.mxu0 0.0
    %95 = vmatpush1.msra.mxu0 0.0
    %96 = vmatprep.subr.mxu0 0.0
    %97 = vmatpush1.msra.mxu0 0.0
    %98 = vmatprep.subr.mxu0 0.0
    %99 = vmatpush1.msra.mxu0 0.0
    %100 = vmatprep.subr.mxu0 0.0
    %101 = vmatpush1.msra.mxu0 0.0
    %102 = vmatprep.subr.mxu0 0.0
    %103 = vmatpush1.msra.mxu0 0.0
    %104 = vmatprep.subr.mxu0 0.0
    %105 = vmatpush1.msra.mxu0 0.0
    %106 = vmatprep.subr.mxu0 0.0
    %107 = vmatpush1.msra.mxu0 0.0
    %108 = vmatprep.subr.mxu0 0.0
    %109 = vmatpush1.msra.mxu0 0.0
    %110 = vmatprep.subr.mxu0 0.0
    %111 = vmatpush1.msra.mxu0 0.0
    %112 = vmatprep.subr.mxu0 0.0
    %113 = vmatpush1.msra.mxu0 0.0
    %114 = vmatprep.subr.mxu0 0.0
    %115 = vmatpush1.msra.mxu0 0.0
    %116 = vmatprep.subr.mxu0 0.0
    %117 = vmatpush1.msra.mxu0 0.0
    %118 = vmatprep.subr.mxu0 0.0
    %119 = vmatpush1.msra.mxu0 0.0
    %120 = vmatprep.mubr.f32.mxu0 0.0
    %121 = vmatmul.mubr.f32.gmra.mrb[0].mxu0 %v54
    %v122 = vpop.f32.mrb[0].mxu0
    %v123 = vadd.f32 %v50, %v122
    %v124 = vpop.f32.mrb[0].mxu0
    %125 = vdwg.mxu0
    %126 = vst [vmem:[%s3] sm:$0x3] %v123
    // Predicated region
    $region22: #{forward.1} parent=1 // pred_check
      _
    $region23: #{forward.1} parent=1 // pred_check_branch
      %128 = sbr.rel (0) target = $region25
    $region24: #{forward.1} parent=1 // pred_region
      _
    $region25: #{forward.1} parent=1 // pred_fallthru
      _
    // Predicated region
    $region26: #{forward.1} parent=1 // pred_check
      _
    $region27: #{forward.1} parent=1 // pred_check_branch
      %130 = sbr.rel (0) target = $region29
    $region28: #{forward.1} parent=1 // pred_region
      _
    $region29: #{forward.1} parent=1 // pred_fallthru
      _
    %131 = vsyncpa [#allocation3], 1
    %132 = vsyncpa [#allocation5], 1

</llo_original>
